<compile_context>
chip_gen: v6e
topology: v6e:2x2x1
jax: 0.10.0
libtpu: 0.0.40
codegen_flags: <defaults>
</compile_context>

<pallas_src>
import jax
import jax.numpy as jnp
from jax import lax
from jax.experimental import pallas as pl
from jax.experimental.pallas import tpu as pltpu


def _round_up(x, m):
    return (x + m - 1) // m * m


def _make_kernel(n_total, n_pad_samples, c, r_blk, lane, tiles_per_shard):
    tile_samples = r_blk * lane
    any_pad = (n_pad_samples != n_total)

    def kernel(dist_ref, logits_ref, targets_ref, out_ref, acc_ref):
        shard = pl.program_id(0)
        step = pl.program_id(1)

        @pl.when(step == 0)
        def _init():
            acc_ref[...] = jnp.zeros_like(acc_ref)

        t = targets_ref[...]                                        # (R, L) int32
        # per-class slices, upcast to f32 (exact for bf16 inputs)
        xs = [logits_ref[i].astype(jnp.float32) for i in range(c)]  # c x (R, L)

        # running max over the class axis (pure VALU chain, no XLU)
        m = xs[0]
        for i in range(1, c):
            m = jnp.maximum(m, xs[i])

        # log-sum-exp and target-class logit (scalar-constant compares, no one-hot)
        s = jnp.exp(xs[0] - m)
        x_t = jnp.where(t == 0, xs[0], 0.0)
        for i in range(1, c):
            s = s + jnp.exp(xs[i] - m)
            x_t = x_t + jnp.where(t == i, xs[i], 0.0)
        ce = (m - x_t) + jnp.log(s)                                 # -log_softmax[target]

        # argmax with first-index tie-break: overwrite from last class to first
        pred = jnp.full((r_blk, lane), c - 1, dtype=jnp.int32)
        for i in range(c - 2, -1, -1):
            pred = jnp.where(xs[i] == m, jnp.int32(i), pred)

        # distances = D[target, pred] via flat index + select chain over SMEM scalars
        dvals = [dist_ref[i, j] for i in range(c) for j in range(c)]
        flat = t * c + pred
        dist = jnp.zeros((r_blk, lane), jnp.float32)
        for k in range(c * c):
            dist = jnp.where(flat == k, dvals[k], dist)

        contrib = ce * dist                                         # (R, L)

        if not any_pad:
            acc_ref[...] = acc_ref[...] + contrib
        else:
            tile_idx = shard * tiles_per_shard + step
            tile_start = tile_idx * tile_samples
            is_ragged = tile_start + tile_samples > n_total         # scalar bool

            @pl.when(jnp.logical_not(is_ragged))
            def _full():
                acc_ref[...] = acc_ref[...] + contrib

            @pl.when(is_ragged)
            def _masked():
                ri = lax.broadcasted_iota(jnp.int32, (r_blk, lane), 0)
                li = lax.broadcasted_iota(jnp.int32, (r_blk, lane), 1)
                idx = tile_start + ri * lane + li
                acc_ref[...] = acc_ref[...] + jnp.where(idx < n_total, contrib, 0.0)

        @pl.when(step == pl.num_programs(1) - 1)
        def _finalize():
            col = jnp.sum(acc_ref[...], axis=1, keepdims=True)      # (R, 1)
            out_ref[...] = jnp.sum(col, axis=0, keepdims=True)      # (1, 1)

    return kernel


def custom_farthest_loss(logits, targets, distance_matrix, *, lane=1024,
                         rows_per_tile=128):
    """logits: (N, C) f32/bf16, targets: (N,) int, distance_matrix: (C, C)."""
    n, c = logits.shape
    dist = distance_matrix.astype(jnp.float32)
    assert dist.shape == (c, c), "distance matrix / class-count mismatch"

    lane = _round_up(max(lane, 128), 128)
    rows_per_tile = _round_up(max(rows_per_tile, 8), 8)

    # Fold samples into a dense (rows, lanes) layout.
    n_rows = max(-(-n // lane), 1)
    r_blk = min(rows_per_tile, _round_up(n_rows, 8))      # multiple of 8
    n_rows_pad = _round_up(n_rows, r_blk)
    num_tiles = n_rows_pad // r_blk

    # Guarantee the 2-way TensorCore shard (v7x) whenever there are >= 2 tiles.
    num_shards = 1
    if num_tiles >= 2:
        num_shards = 2
        if num_tiles % 2:
            num_tiles += 1
            n_rows_pad = num_tiles * r_blk
    tiles_per_shard = num_tiles // num_shards

    n_pad_samples = n_rows_pad * lane
    pad = n_pad_samples - n

    # TODO(synk): produce this (C, rows, lane) layout upstream to avoid the extra pass.
    logits_t = jnp.pad(logits, ((0, pad), (0, 0))).T.reshape(c, n_rows_pad, lane)
    targets_r = jnp.pad(targets.astype(jnp.int32), (0, pad)).reshape(n_rows_pad, lane)

    kernel = _make_kernel(n, n_pad_samples, c, r_blk, lane, tiles_per_shard)

    partials = pl.pallas_call(
        kernel,
        out_shape=jax.ShapeDtypeStruct((num_shards, 1, 1), jnp.float32),
        grid=(num_shards, tiles_per_shard),
        in_specs=[
            pl.BlockSpec(memory_space=pltpu.MemorySpace.SMEM),        # (C, C) distances
            pl.BlockSpec((c, r_blk, lane),
                         lambda s, i: (0, s * tiles_per_shard + i, 0)),
            pl.BlockSpec((r_blk, lane),
                         lambda s, i: (s * tiles_per_shard + i, 0)),
        ],
        out_specs=pl.BlockSpec((None, 1, 1), lambda s, i: (s, 0, 0)),
        scratch_shapes=[pltpu.VMEM((r_blk, lane), jnp.float32)],
        compiler_params=pltpu.CompilerParams(
            dimension_semantics=("parallel", "arbitrary")),
    )(dist, logits_t, targets_r)

    return jnp.sum(partials) / jnp.float32(n)


if __name__ == "__main__":
    C = 4
    # Deterministic "parameter" from the module's __init__.
    distance_matrix = jnp.array(
        [[1.0, 1.0, 1.0, 0.01],
         [1.0, 1.0, 0.01, 1.0],
         [1.0, 0.01, 1.0, 1.0],
         [0.01, 1.0, 1.0, 1.0]], dtype=jnp.float32)

    def reference(lg, tg):
        log_probs = jax.nn.log_softmax(lg.astype(jnp.float32), axis=1)
        ce = -jnp.take_along_axis(log_probs, tg[:, None], axis=1)[:, 0]
        pred = jnp.argmax(lg, axis=1)
        d = distance_matrix[tg, pred]
        return jnp.mean(ce * d)

    key = jax.random.PRNGKey(0)

    # Small demo shape implied by the module: a batch of logits over 4 classes.
    k1, k2 = jax.random.split(key)
    logits = jax.random.normal(k1, (8, C), dtype=jnp.float32)
    targets = jax.random.randint(k2, (8,), 0, C, dtype=jnp.int32)
    loss = jax.block_until_ready(custom_farthest_loss(logits, targets, distance_matrix))
    ref = reference(logits, targets)
    assert jnp.allclose(loss, ref, atol=1e-5, rtol=1e-4), (loss, ref)

    # Extra checks: single ragged tile, multi-tile + 2-shard with parity padding,
    # and an exact multiple (no masking path at all).
    checks = [
        dict(n=300, lane=128, rows_per_tile=8),    # 1 ragged (masked) tile
        dict(n=3000, lane=128, rows_per_tile=8),   # 3 tiles -> padded to 4, 2 shards
        dict(n=4096, lane=128, rows_per_tile=8),   # 4 tiles, 2 shards, no padding
    ]
    for cfg in checks:
        ka, kb, key = jax.random.split(key, 3)
        lg = jax.random.normal(ka, (cfg["n"], C), dtype=jnp.float32)
        tg = jax.random.randint(kb, (cfg["n"],), 0, C, dtype=jnp.int32)
        got = jax.block_until_ready(custom_farthest_loss(
            lg, tg, distance_matrix,
            lane=cfg["lane"], rows_per_tile=cfg["rows_per_tile"]))
        want = reference(lg, tg)
        assert jnp.allclose(got, want, atol=1e-5, rtol=1e-4), (cfg, got, want)

    print("KERNEL_OK")
</pallas_src>

<mosaic_0001>
module attributes {stable_mosaic.version = 11 : i64} {
  func.func @kernel(%arg0: i32, %arg1: i32, %arg2: memref<4x4xf32, #tpu.memory_space<smem>>, %arg3: memref<4x8x1024xf32, #tpu.memory_space<vmem>>, %arg4: memref<8x1024xi32, #tpu.memory_space<vmem>>, %arg5: memref<1x1x1xf32, #tpu.memory_space<vmem>>, %arg6: memref<8x1024xf32, #tpu.memory_space<vmem>>) attributes {dimension_semantics = [#tpu.dimension_semantics<parallel>, #tpu.dimension_semantics<arbitrary>], iteration_bounds = array<i64: 1, 1>, scalar_prefetch = 0 : i64, scratch_operands = 1 : i64, tpu.core_type = #tpu.core_type<tc>, window_params = [{transform_indices = @transform_0, window_bounds = array<i64: 4, 4>}, {transform_indices = @transform_1, window_bounds = array<i64: 4, 8, 1024>}, {transform_indices = @transform_2, window_bounds = array<i64: 8, 1024>}, {transform_indices = @transform_3, window_bounds = array<i64: 1, 1, 1>}]} {
    %c0_i32 = arith.constant 0 : i32
    %0 = arith.cmpi eq, %arg1, %c0_i32 : i32
    %1 = arith.extui %0 : i1 to i32
    %c0_i32_0 = arith.constant 0 : i32
    %2 = arith.cmpi ne, %1, %c0_i32_0 : i32
    scf.if %2 {
      %cst_64 = arith.constant 0.000000e+00 : f32
      %156 = vector.broadcast %cst_64 : f32 to vector<8x1024xf32>
      %c0_65 = arith.constant 0 : index
      %c0_66 = arith.constant 0 : index
      %157 = vector.load %arg6[%c0_65, %c0_66] : memref<8x1024xf32, #tpu.memory_space<vmem>>, vector<8x1024xf32>
      tpu.vector_store %arg6[%c0_65, %c0_66], %156 {strides = array<i32>} : memref<8x1024xf32, #tpu.memory_space<vmem>>, vector<8x1024xf32>,
    } else {
    }
    %c0 = arith.constant 0 : index
    %c0_1 = arith.constant 0 : index
    %3 = vector.load %arg4[%c0, %c0_1] : memref<8x1024xi32, #tpu.memory_space<vmem>>, vector<8x1024xi32>
    %c0_2 = arith.constant 0 : index
    %c0_3 = arith.constant 0 : index
    %c0_4 = arith.constant 0 : index
    %4 = vector.load %arg3[%c0_2, %c0_3, %c0_4] : memref<4x8x1024xf32, #tpu.memory_space<vmem>>, vector<1x8x1024xf32>
    %5 = vector.shape_cast %4 : vector<1x8x1024xf32> to vector<8x1024xf32>
    %c1 = arith.constant 1 : index
    %c0_5 = arith.constant 0 : index
    %c0_6 = arith.constant 0 : index
    %6 = vector.load %arg3[%c1, %c0_5, %c0_6] : memref<4x8x1024xf32, #tpu.memory_space<vmem>>, vector<1x8x1024xf32>
    %7 = vector.shape_cast %6 : vector<1x8x1024xf32> to vector<8x1024xf32>
    %c2 = arith.constant 2 : index
    %c0_7 = arith.constant 0 : index
    %c0_8 = arith.constant 0 : index
    %8 = vector.load %arg3[%c2, %c0_7, %c0_8] : memref<4x8x1024xf32, #tpu.memory_space<vmem>>, vector<1x8x1024xf32>
    %9 = vector.shape_cast %8 : vector<1x8x1024xf32> to vector<8x1024xf32>
    %c3 = arith.constant 3 : index
    %c0_9 = arith.constant 0 : index
    %c0_10 = arith.constant 0 : index
    %10 = vector.load %arg3[%c3, %c0_9, %c0_10] : memref<4x8x1024xf32, #tpu.memory_space<vmem>>, vector<1x8x1024xf32>
    %11 = vector.shape_cast %10 : vector<1x8x1024xf32> to vector<8x1024xf32>
    %12 = arith.maximumf %5, %7 : vector<8x1024xf32>
    %13 = arith.maximumf %12, %9 : vector<8x1024xf32>
    %14 = arith.maximumf %13, %11 : vector<8x1024xf32>
    %15 = arith.subf %5, %14 : vector<8x1024xf32>
    %16 = math.exp %15 : vector<8x1024xf32>
    %c0_i32_11 = arith.constant 0 : i32
    %17 = vector.broadcast %c0_i32_11 : i32 to vector<8x1024xi32>
    %18 = arith.cmpi eq, %3, %17 : vector<8x1024xi32>
    %cst = arith.constant 0.000000e+00 : f32
    %19 = vector.broadcast %cst : f32 to vector<8x1024xf32>
    %20 = arith.select %18, %5, %19 : vector<8x1024xi1>, vector<8x1024xf32>
    %21 = arith.subf %7, %14 : vector<8x1024xf32>
    %22 = math.exp %21 : vector<8x1024xf32>
    %23 = arith.addf %16, %22 : vector<8x1024xf32>
    %c1_i32 = arith.constant 1 : i32
    %24 = vector.broadcast %c1_i32 : i32 to vector<8x1024xi32>
    %25 = arith.cmpi eq, %3, %24 : vector<8x1024xi32>
    %cst_12 = arith.constant 0.000000e+00 : f32
    %26 = vector.broadcast %cst_12 : f32 to vector<8x1024xf32>
    %27 = arith.select %25, %7, %26 : vector<8x1024xi1>, vector<8x1024xf32>
    %28 = arith.addf %20, %27 : vector<8x1024xf32>
    %29 = arith.subf %9, %14 : vector<8x1024xf32>
    %30 = math.exp %29 : vector<8x1024xf32>
    %31 = arith.addf %23, %30 : vector<8x1024xf32>
    %c2_i32 = arith.constant 2 : i32
    %32 = vector.broadcast %c2_i32 : i32 to vector<8x1024xi32>
    %33 = arith.cmpi eq, %3, %32 : vector<8x1024xi32>
    %cst_13 = arith.constant 0.000000e+00 : f32
    %34 = vector.broadcast %cst_13 : f32 to vector<8x1024xf32>
    %35 = arith.select %33, %9, %34 : vector<8x1024xi1>, vector<8x1024xf32>
    %36 = arith.addf %28, %35 : vector<8x1024xf32>
    %37 = arith.subf %11, %14 : vector<8x1024xf32>
    %38 = math.exp %37 : vector<8x1024xf32>
    %39 = arith.addf %31, %38 : vector<8x1024xf32>
    %c3_i32 = arith.constant 3 : i32
    %40 = vector.broadcast %c3_i32 : i32 to vector<8x1024xi32>
    %41 = arith.cmpi eq, %3, %40 : vector<8x1024xi32>
    %cst_14 = arith.constant 0.000000e+00 : f32
    %42 = vector.broadcast %cst_14 : f32 to vector<8x1024xf32>
    %43 = arith.select %41, %11, %42 : vector<8x1024xi1>, vector<8x1024xf32>
    %44 = arith.addf %36, %43 : vector<8x1024xf32>
    %45 = arith.subf %14, %44 : vector<8x1024xf32>
    %46 = math.log %39 : vector<8x1024xf32>
    %47 = arith.addf %45, %46 : vector<8x1024xf32>
    %c3_i32_15 = arith.constant 3 : i32
    %48 = vector.broadcast %c3_i32_15 : i32 to vector<8x1024xi32>
    %49 = arith.cmpf oeq, %9, %14 : vector<8x1024xf32>
    %c2_i32_16 = arith.constant 2 : i32
    %50 = vector.broadcast %c2_i32_16 : i32 to vector<8x1024xi32>
    %51 = arith.select %49, %50, %48 : vector<8x1024xi1>, vector<8x1024xi32>
    %52 = arith.cmpf oeq, %7, %14 : vector<8x1024xf32>
    %c1_i32_17 = arith.constant 1 : i32
    %53 = vector.broadcast %c1_i32_17 : i32 to vector<8x1024xi32>
    %54 = arith.select %52, %53, %51 : vector<8x1024xi1>, vector<8x1024xi32>
    %55 = arith.cmpf oeq, %5, %14 : vector<8x1024xf32>
    %c0_i32_18 = arith.constant 0 : i32
    %56 = vector.broadcast %c0_i32_18 : i32 to vector<8x1024xi32>
    %57 = arith.select %55, %56, %54 : vector<8x1024xi1>, vector<8x1024xi32>
    %c0_19 = arith.constant 0 : index
    %c0_20 = arith.constant 0 : index
    %58 = memref.load %arg2[%c0_19, %c0_20] : memref<4x4xf32, #tpu.memory_space<smem>>
    %c0_21 = arith.constant 0 : index
    %c1_22 = arith.constant 1 : index
    %59 = memref.load %arg2[%c0_21, %c1_22] : memref<4x4xf32, #tpu.memory_space<smem>>
    %c0_23 = arith.constant 0 : index
    %c2_24 = arith.constant 2 : index
    %60 = memref.load %arg2[%c0_23, %c2_24] : memref<4x4xf32, #tpu.memory_space<smem>>
    %c0_25 = arith.constant 0 : index
    %c3_26 = arith.constant 3 : index
    %61 = memref.load %arg2[%c0_25, %c3_26] : memref<4x4xf32, #tpu.memory_space<smem>>
    %c1_27 = arith.constant 1 : index
    %c0_28 = arith.constant 0 : index
    %62 = memref.load %arg2[%c1_27, %c0_28] : memref<4x4xf32, #tpu.memory_space<smem>>
    %c1_29 = arith.constant 1 : index
    %c1_30 = arith.constant 1 : index
    %63 = memref.load %arg2[%c1_29, %c1_30] : memref<4x4xf32, #tpu.memory_space<smem>>
    %c1_31 = arith.constant 1 : index
    %c2_32 = arith.constant 2 : index
    %64 = memref.load %arg2[%c1_31, %c2_32] : memref<4x4xf32, #tpu.memory_space<smem>>
    %c1_33 = arith.constant 1 : index
    %c3_34 = arith.constant 3 : index
    %65 = memref.load %arg2[%c1_33, %c3_34] : memref<4x4xf32, #tpu.memory_space<smem>>
    %c2_35 = arith.constant 2 : index
    %c0_36 = arith.constant 0 : index
    %66 = memref.load %arg2[%c2_35, %c0_36] : memref<4x4xf32, #tpu.memory_space<smem>>
    %c2_37 = arith.constant 2 : index
    %c1_38 = arith.constant 1 : index
    %67 = memref.load %arg2[%c2_37, %c1_38] : memref<4x4xf32, #tpu.memory_space<smem>>
    %c2_39 = arith.constant 2 : index
    %c2_40 = arith.constant 2 : index
    %68 = memref.load %arg2[%c2_39, %c2_40] : memref<4x4xf32, #tpu.memory_space<smem>>
    %c2_41 = arith.constant 2 : index
    %c3_42 = arith.constant 3 : index
    %69 = memref.load %arg2[%c2_41, %c3_42] : memref<4x4xf32, #tpu.memory_space<smem>>
    %c3_43 = arith.constant 3 : index
    %c0_44 = arith.constant 0 : index
    %70 = memref.load %arg2[%c3_43, %c0_44] : memref<4x4xf32, #tpu.memory_space<smem>>
    %c3_45 = arith.constant 3 : index
    %c1_46 = arith.constant 1 : index
    %71 = memref.load %arg2[%c3_45, %c1_46] : memref<4x4xf32, #tpu.memory_space<smem>>
    %c3_47 = arith.constant 3 : index
    %c2_48 = arith.constant 2 : index
    %72 = memref.load %arg2[%c3_47, %c2_48] : memref<4x4xf32, #tpu.memory_space<smem>>
    %c3_49 = arith.constant 3 : index
    %c3_50 = arith.constant 3 : index
    %73 = memref.load %arg2[%c3_49, %c3_50] : memref<4x4xf32, #tpu.memory_space<smem>>
    %c4_i32 = arith.constant 4 : i32
    %74 = vector.broadcast %c4_i32 : i32 to vector<8x1024xi32>
    %75 = arith.muli %3, %74 : vector<8x1024xi32>
    %76 = arith.addi %75, %57 : vector<8x1024xi32>
    %cst_51 = arith.constant 0.000000e+00 : f32
    %77 = vector.broadcast %cst_51 : f32 to vector<8x1024xf32>
    %c0_i32_52 = arith.constant 0 : i32
    %78 = vector.broadcast %c0_i32_52 : i32 to vector<8x1024xi32>
    %79 = arith.cmpi eq, %76, %78 : vector<8x1024xi32>
    %80 = vector.broadcast %58 : f32 to vector<8x1024xf32>
    %81 = arith.select %79, %80, %77 : vector<8x1024xi1>, vector<8x1024xf32>
    %c1_i32_53 = arith.constant 1 : i32
    %82 = vector.broadcast %c1_i32_53 : i32 to vector<8x1024xi32>
    %83 = arith.cmpi eq, %76, %82 : vector<8x1024xi32>
    %84 = vector.broadcast %59 : f32 to vector<8x1024xf32>
    %85 = arith.select %83, %84, %81 : vector<8x1024xi1>, vector<8x1024xf32>
    %c2_i32_54 = arith.constant 2 : i32
    %86 = vector.broadcast %c2_i32_54 : i32 to vector<8x1024xi32>
    %87 = arith.cmpi eq, %76, %86 : vector<8x1024xi32>
    %88 = vector.broadcast %60 : f32 to vector<8x1024xf32>
    %89 = arith.select %87, %88, %85 : vector<8x1024xi1>, vector<8x1024xf32>
    %c3_i32_55 = arith.constant 3 : i32
    %90 = vector.broadcast %c3_i32_55 : i32 to vector<8x1024xi32>
    %91 = arith.cmpi eq, %76, %90 : vector<8x1024xi32>
    %92 = vector.broadcast %61 : f32 to vector<8x1024xf32>
    %93 = arith.select %91, %92, %89 : vector<8x1024xi1>, vector<8x1024xf32>
    %c4_i32_56 = arith.constant 4 : i32
    %94 = vector.broadcast %c4_i32_56 : i32 to vector<8x1024xi32>
    %95 = arith.cmpi eq, %76, %94 : vector<8x1024xi32>
    %96 = vector.broadcast %62 : f32 to vector<8x1024xf32>
    %97 = arith.select %95, %96, %93 : vector<8x1024xi1>, vector<8x1024xf32>
    %c5_i32 = arith.constant 5 : i32
    %98 = vector.broadcast %c5_i32 : i32 to vector<8x1024xi32>
    %99 = arith.cmpi eq, %76, %98 : vector<8x1024xi32>
    %100 = vector.broadcast %63 : f32 to vector<8x1024xf32>
    %101 = arith.select %99, %100, %97 : vector<8x1024xi1>, vector<8x1024xf32>
    %c6_i32 = arith.constant 6 : i32
    %102 = vector.broadcast %c6_i32 : i32 to vector<8x1024xi32>
    %103 = arith.cmpi eq, %76, %102 : vector<8x1024xi32>
    %104 = vector.broadcast %64 : f32 to vector<8x1024xf32>
    %105 = arith.select %103, %104, %101 : vector<8x1024xi1>, vector<8x1024xf32>
    %c7_i32 = arith.constant 7 : i32
    %106 = vector.broadcast %c7_i32 : i32 to vector<8x1024xi32>
    %107 = arith.cmpi eq, %76, %106 : vector<8x1024xi32>
    %108 = vector.broadcast %65 : f32 to vector<8x1024xf32>
    %109 = arith.select %107, %108, %105 : vector<8x1024xi1>, vector<8x1024xf32>
    %c8_i32 = arith.constant 8 : i32
    %110 = vector.broadcast %c8_i32 : i32 to vector<8x1024xi32>
    %111 = arith.cmpi eq, %76, %110 : vector<8x1024xi32>
    %112 = vector.broadcast %66 : f32 to vector<8x1024xf32>
    %113 = arith.select %111, %112, %109 : vector<8x1024xi1>, vector<8x1024xf32>
    %c9_i32 = arith.constant 9 : i32
    %114 = vector.broadcast %c9_i32 : i32 to vector<8x1024xi32>
    %115 = arith.cmpi eq, %76, %114 : vector<8x1024xi32>
    %116 = vector.broadcast %67 : f32 to vector<8x1024xf32>
    %117 = arith.select %115, %116, %113 : vector<8x1024xi1>, vector<8x1024xf32>
    %c10_i32 = arith.constant 10 : i32
    %118 = vector.broadcast %c10_i32 : i32 to vector<8x1024xi32>
    %119 = arith.cmpi eq, %76, %118 : vector<8x1024xi32>
    %120 = vector.broadcast %68 : f32 to vector<8x1024xf32>
    %121 = arith.select %119, %120, %117 : vector<8x1024xi1>, vector<8x1024xf32>
    %c11_i32 = arith.constant 11 : i32
    %122 = vector.broadcast %c11_i32 : i32 to vector<8x1024xi32>
    %123 = arith.cmpi eq, %76, %122 : vector<8x1024xi32>
    %124 = vector.broadcast %69 : f32 to vector<8x1024xf32>
    %125 = arith.select %123, %124, %121 : vector<8x1024xi1>, vector<8x1024xf32>
    %c12_i32 = arith.constant 12 : i32
    %126 = vector.broadcast %c12_i32 : i32 to vector<8x1024xi32>
    %127 = arith.cmpi eq, %76, %126 : vector<8x1024xi32>
    %128 = vector.broadcast %70 : f32 to vector<8x1024xf32>
    %129 = arith.select %127, %128, %125 : vector<8x1024xi1>, vector<8x1024xf32>
    %c13_i32 = arith.constant 13 : i32
    %130 = vector.broadcast %c13_i32 : i32 to vector<8x1024xi32>
    %131 = arith.cmpi eq, %76, %130 : vector<8x1024xi32>
    %132 = vector.broadcast %71 : f32 to vector<8x1024xf32>
    %133 = arith.select %131, %132, %129 : vector<8x1024xi1>, vector<8x1024xf32>
    %c14_i32 = arith.constant 14 : i32
    %134 = vector.broadcast %c14_i32 : i32 to vector<8x1024xi32>
    %135 = arith.cmpi eq, %76, %134 : vector<8x1024xi32>
    %136 = vector.broadcast %72 : f32 to vector<8x1024xf32>
    %137 = arith.select %135, %136, %133 : vector<8x1024xi1>, vector<8x1024xf32>
    %c15_i32 = arith.constant 15 : i32
    %138 = vector.broadcast %c15_i32 : i32 to vector<8x1024xi32>
    %139 = arith.cmpi eq, %76, %138 : vector<8x1024xi32>
    %140 = vector.broadcast %73 : f32 to vector<8x1024xf32>
    %141 = arith.select %139, %140, %137 : vector<8x1024xi1>, vector<8x1024xf32>
    %142 = arith.mulf %47, %141 : vector<8x1024xf32>
    %c1_i32_57 = arith.constant 1 : i32
    %143 = arith.muli %arg0, %c1_i32_57 : i32
    %144 = arith.addi %143, %arg1 : i32
    %c8192_i32 = arith.constant 8192 : i32
    %145 = arith.muli %144, %c8192_i32 : i32
    %c8192_i32_58 = arith.constant 8192 : i32
    %146 = arith.addi %145, %c8192_i32_58 : i32
    %c8_i32_59 = arith.constant 8 : i32
    %147 = arith.cmpi sgt, %146, %c8_i32_59 : i32
    %true = arith.constant true
    %148 = arith.xori %147, %true : i1
    %149 = arith.extui %148 : i1 to i32
    %c0_i32_60 = arith.constant 0 : i32
    %150 = arith.cmpi ne, %149, %c0_i32_60 : i32
    scf.if %150 {
      %c0_64 = arith.constant 0 : index
      %c0_65 = arith.constant 0 : index
      %156 = vector.load %arg6[%c0_64, %c0_65] : memref<8x1024xf32, #tpu.memory_space<vmem>>, vector<8x1024xf32>
      %157 = arith.addf %156, %142 : vector<8x1024xf32>
      %c0_66 = arith.constant 0 : index
      %c0_67 = arith.constant 0 : index
      %158 = vector.load %arg6[%c0_66, %c0_67] : memref<8x1024xf32, #tpu.memory_space<vmem>>, vector<8x1024xf32>
      tpu.vector_store %arg6[%c0_66, %c0_67], %157 {strides = array<i32>} : memref<8x1024xf32, #tpu.memory_space<vmem>>, vector<8x1024xf32>,
    } else {
    }
    %151 = arith.extui %147 : i1 to i32
    %c0_i32_61 = arith.constant 0 : i32
    %152 = arith.cmpi ne, %151, %c0_i32_61 : i32
    scf.if %152 {
      %156 = tpu.iota {dimensions = array<i32: 0>} : vector<8x1024xi32>
      %157 = tpu.iota {dimensions = array<i32: 1>} : vector<8x1024xi32>
      %c1024_i32 = arith.constant 1024 : i32
      %158 = vector.broadcast %c1024_i32 : i32 to vector<8x1024xi32>
      %159 = arith.muli %156, %158 : vector<8x1024xi32>
      %160 = vector.broadcast %145 : i32 to vector<8x1024xi32>
      %161 = arith.addi %160, %159 : vector<8x1024xi32>
      %162 = arith.addi %161, %157 : vector<8x1024xi32>
      %c0_64 = arith.constant 0 : index
      %c0_65 = arith.constant 0 : index
      %163 = vector.load %arg6[%c0_64, %c0_65] : memref<8x1024xf32, #tpu.memory_space<vmem>>, vector<8x1024xf32>
      %c8_i32_66 = arith.constant 8 : i32
      %164 = vector.broadcast %c8_i32_66 : i32 to vector<8x1024xi32>
      %165 = arith.cmpi slt, %162, %164 : vector<8x1024xi32>
      %cst_67 = arith.constant 0.000000e+00 : f32
      %166 = vector.broadcast %cst_67 : f32 to vector<8x1024xf32>
      %167 = arith.select %165, %142, %166 : vector<8x1024xi1>, vector<8x1024xf32>
      %168 = arith.addf %163, %167 : vector<8x1024xf32>
      %c0_68 = arith.constant 0 : index
      %c0_69 = arith.constant 0 : index
      %169 = vector.load %arg6[%c0_68, %c0_69] : memref<8x1024xf32, #tpu.memory_space<vmem>>, vector<8x1024xf32>
      tpu.vector_store %arg6[%c0_68, %c0_69], %168 {strides = array<i32>} : memref<8x1024xf32, #tpu.memory_space<vmem>>, vector<8x1024xf32>,
    } else {
    }
    %c0_i32_62 = arith.constant 0 : i32
    %153 = arith.cmpi eq, %arg1, %c0_i32_62 : i32
    %154 = arith.extui %153 : i1 to i32
    %c0_i32_63 = arith.constant 0 : i32
    %155 = arith.cmpi ne, %154, %c0_i32_63 : i32
    scf.if %155 {
      %c0_64 = arith.constant 0 : index
      %c0_65 = arith.constant 0 : index
      %156 = vector.load %arg6[%c0_64, %c0_65] : memref<8x1024xf32, #tpu.memory_space<vmem>>, vector<8x1024xf32>
      %cst_66 = arith.constant dense<0.000000e+00> : vector<8xf32>
      %157 = vector.multi_reduction <add>, %156, %cst_66 [1] : vector<8x1024xf32> to vector<8xf32>
      %158 = vector.shape_cast %157 : vector<8xf32> to vector<8x1xf32>
      %cst_67 = arith.constant dense<0.000000e+00> : vector<1xf32>
      %159 = vector.multi_reduction <add>, %158, %cst_67 [0] : vector<8x1xf32> to vector<1xf32>
      %160 = vector.shape_cast %159 : vector<1xf32> to vector<1x1xf32>
      %c0_68 = arith.constant 0 : index
      %c0_69 = arith.constant 0 : index
      %c0_70 = arith.constant 0 : index
      %161 = vector.load %arg5[%c0_68, %c0_69, %c0_70] : memref<1x1x1xf32, #tpu.memory_space<vmem>>, vector<1x1x1xf32>
      %162 = vector.shape_cast %161 : vector<1x1x1xf32> to vector<1x1xf32>
      %163 = vector.shape_cast %160 : vector<1x1xf32> to vector<1x1x1xf32>
      tpu.vector_store %arg5[%c0_68, %c0_69, %c0_70], %163 {strides = array<i32>} : memref<1x1x1xf32, #tpu.memory_space<vmem>>, vector<1x1x1xf32>,
    } else {
    }
    return
  }
  func.func @transform_0(%arg0: i32, %arg1: i32) -> (i32, i32) {
    %c0_i32 = arith.constant 0 : i32
    %c0_i32_0 = arith.constant 0 : i32
    %c0_i32_1 = arith.constant 0 : i32
    return %c0_i32, %c0_i32_0 : i32, i32
  }
  func.func @transform_1(%arg0: i32, %arg1: i32) -> (i32, i32, i32) {
    %c1_i32 = arith.constant 1 : i32
    %0 = arith.muli %arg0, %c1_i32 : i32
    %1 = arith.addi %0, %arg1 : i32
    %c0_i32 = arith.constant 0 : i32
    %c0_i32_0 = arith.constant 0 : i32
    %c0_i32_1 = arith.constant 0 : i32
    return %c0_i32, %1, %c0_i32_0 : i32, i32, i32
  }
  func.func @transform_2(%arg0: i32, %arg1: i32) -> (i32, i32) {
    %c1_i32 = arith.constant 1 : i32
    %0 = arith.muli %arg0, %c1_i32 : i32
    %1 = arith.addi %0, %arg1 : i32
    %c0_i32 = arith.constant 0 : i32
    %c0_i32_0 = arith.constant 0 : i32
    return %1, %c0_i32 : i32, i32
  }
  func.func @transform_3(%arg0: i32, %arg1: i32) -> (i32, i32, i32) {
    %c0_i32 = arith.constant 0 : i32
    %c0_i32_0 = arith.constant 0 : i32
    %c0_i32_1 = arith.constant 0 : i32
    return %arg0, %c0_i32, %c0_i32_0 : i32, i32, i32
  }
}

</mosaic_0001>

<llo_original>
// kernel: tpu_custom_call.1
$region0: #{tpu_custom_call.1}
  #allocation0 [shape = 'u32[]', space=smem, size = 0x4, offset = 0x4, fixed_abs, tag = 'smem constant byte address 0x4 - core index']
  #allocation1 [shape = 'u32[144,128]{1,0:T(1,128)}', space=vmem, size = 0x12000, scoped, tag = 'internal scratch']
  #allocation2 [shape = 'f32[8,1024]{1,0:T(8,128)}', space=vmem, size = 0x8000, scoped, tag = 'scratch operand']
  %s0 = inlined_call_operand.hbm [shape: f32[4,4], index: 0, kind: input, shape index: {}]
  %s1 = inlined_call_operand.hbm [shape: f32[4,8,1024], index: 1, kind: input, shape index: {}]
  %s2 = inlined_call_operand.hbm [shape: s32[8,1024], index: 2, kind: input, shape index: {}]
  %s3 = inlined_call_operand.hbm [shape: f32[1,1,1], index: 3, kind: output, shape index: {}]
  %s4 = sld [smem:[#allocation0]]
  $region50: #{tpu_custom_call.1} parent=0
    _
  %s6 = ssub.s32 1, %s4
  %s7 = scalar_select 0, %s6, %s4
  $region1: #{tpu_custom_call.1} parent=0
    #allocation3 [shape = 'u8[2048]{0}', space=smem, size = 0x800, scoped, tag = 'input window, operand 0, single buffered']
    #allocation4 [shape = 's32[1]{0}', space=sflag, size = 0x4, scoped, tag = 'scoped memory for tpu_custom_call.1']
    #allocation5 [shape = 's32[1]{0}', space=sflag, size = 0x4, scoped, tag = 'scoped memory for tpu_custom_call.1']
    #allocation6 [shape = 's32[1]{0}', space=sflag, size = 0x4, scoped, tag = 'scoped memory for tpu_custom_call.1']
    #allocation7 [shape = 'u8[131072]{0}', space=vmem, size = 0x20000, scoped, tag = 'input window, operand 1, single buffered']
    #allocation8 [shape = 'u8[32768]{0}', space=vmem, size = 0x8000, scoped, tag = 'input window, operand 2, single buffered']
    #allocation9 [shape = 's32[1]{0}', space=sflag, size = 0x4, scoped, tag = 'scoped memory for tpu_custom_call.1']
    #allocation10 [shape = 'u8[512]{0}', space=vmem, size = 0x400, scoped, tag = 'output window, operand 0, single buffered']
    %8 = vsyncpa [#allocation6], 0
    %9 = vsyncpa [#allocation4], 0
    %10 = vsyncpa [#allocation9], 0
    %11 = vsyncpa [#allocation5], 0
    // Predicated region
    $region2: #{tpu_custom_call.1} parent=1 // pred_check
      _
    $region3: #{tpu_custom_call.1} parent=1 // pred_check_branch
      %13 = sbr.rel (0) target = $region5
    $region4: #{tpu_custom_call.1} parent=1 // pred_region
      %s15 = ssub.s32 64, 64
      %16 = vsyncadd [#allocation6], %s15
      %19 = dma.hbm_to_smem %s0, 64, [#allocation3], [#allocation6]
    $region5: #{tpu_custom_call.1} parent=1 // pred_fallthru
      _
    // Predicated region
    $region6: #{tpu_custom_call.1} parent=1 // pred_check
      _
    $region7: #{tpu_custom_call.1} parent=1 // pred_check_branch
      %21 = sbr.rel (0) target = $region9
    $region8: #{tpu_custom_call.1} parent=1 // pred_region
      %s22 = sadd.s32 0, 0
      %s24 = ssub.s32 4096, 4096
      %25 = vsyncadd [#allocation4], %s24
      %s26 = smul.addr %s22, 8
      %s27 = smul.addr %s26, 128
      %s28 = scalar_lea.hbm %s1, %s27
      %s29 = sshll.u32 [#allocation7], 4
      %s30 = int_to_ptr.vmem [resolvable:$true] %s29
      %35 = dma.hbm_to_vmem [thread:$0]  %s28, 4096, %s30, [#allocation4], 1024, 1024, 64
    $region9: #{tpu_custom_call.1} parent=1 // pred_fallthru
      _
    // Predicated region
    $region10: #{tpu_custom_call.1} parent=1 // pred_check
      _
    $region11: #{tpu_custom_call.1} parent=1 // pred_check_branch
      %37 = sbr.rel (0) target = $region13
    $region12: #{tpu_custom_call.1} parent=1 // pred_region
      %s38 = sadd.s32 0, 0
      %s40 = ssub.s32 1024, 1024
      %41 = vsyncadd [#allocation9], %s40
      %s42 = smul.addr %s38, 8
      %s43 = smul.addr %s42, 128
      %s44 = scalar_lea.hbm %s2, %s43
      %s46 = sshll.u32 [#allocation8], 4
      %s47 = int_to_ptr.vmem [resolvable:$true] %s46
      %49 = dma.hbm_to_vmem [thread:$0]  %s44, 1024, %s47, [#allocation9]
    $region13: #{tpu_custom_call.1} parent=1 // pred_fallthru
      _
    // Predicated region
    $region14: #{tpu_custom_call.1} parent=1 // pred_check
      _
    $region15: #{tpu_custom_call.1} parent=1 // pred_check_branch
      %51 = sbr.rel (0) target = $region17
    $region16: #{tpu_custom_call.1} parent=1 // pred_region
      %52 = dma.done [#allocation6], 64
    $region17: #{tpu_custom_call.1} parent=1 // pred_fallthru
      _
    // Predicated region
    $region18: #{tpu_custom_call.1} parent=1 // pred_check
      _
    $region19: #{tpu_custom_call.1} parent=1 // pred_check_branch
      %54 = sbr.rel (0) target = $region21
    $region20: #{tpu_custom_call.1} parent=1 // pred_region
      %55 = dma.done [#allocation4], 4096
    $region21: #{tpu_custom_call.1} parent=1 // pred_fallthru
      _
    // Predicated region
    $region22: #{tpu_custom_call.1} parent=1 // pred_check
      _
    $region23: #{tpu_custom_call.1} parent=1 // pred_check_branch
      %57 = sbr.rel (0) target = $region25
    $region24: #{tpu_custom_call.1} parent=1 // pred_region
      %58 = dma.done [#allocation9], 1024
    $region25: #{tpu_custom_call.1} parent=1 // pred_fallthru
      _
    %59 = sfence
    %s60 = sadd.s32 0, 0
    %s61 = sadd.s32 0, 0
    %p62 = scmp.eq.s32.totalorder 0, 0
    // Predicated region
    $region26: #{tpu_custom_call.1} parent=1 // pred_check
      %p63 = pneg %p62
    $region27: #{tpu_custom_call.1} parent=1 // pred_check_branch
      %65 = sbr.rel (%p63) target = $region29
    $region28: #{tpu_custom_call.1} parent=1 // pred_region
      %66 = vst [vmem:[#allocation2] sm:$0xff] 0.0
      %67 = vst [vmem:[#allocation2 + $0x8] sm:$0xff] 0.0
      %68 = vst [vmem:[#allocation2 + $0x10] sm:$0xff] 0.0
      %69 = vst [vmem:[#allocation2 + $0x18] sm:$0xff] 0.0
      %70 = vst [vmem:[#allocation2 + $0x20] sm:$0xff] 0.0
      %71 = vst [vmem:[#allocation2 + $0x28] sm:$0xff] 0.0
      %72 = vst [vmem:[#allocation2 + $0x30] sm:$0xff] 0.0
      %73 = vst [vmem:[#allocation2 + $0x38] sm:$0xff] 0.0
    $region29: #{tpu_custom_call.1} parent=1 // pred_fallthru
      _
    %v74 = vld [vmem:[#allocation8] sm:$0xff]
    %v75 = vld [vmem:[#allocation8 + $0x8] sm:$0xff]
    %v76 = vld [vmem:[#allocation8 + $0x10] sm:$0xff]
    %v77 = vld [vmem:[#allocation8 + $0x18] sm:$0xff]
    %v78 = vld [vmem:[#allocation8 + $0x20] sm:$0xff]
    %v79 = vld [vmem:[#allocation8 + $0x28] sm:$0xff]
    %v80 = vld [vmem:[#allocation8 + $0x30] sm:$0xff]
    %v81 = vld [vmem:[#allocation8 + $0x38] sm:$0xff]
    %v82 = vld [vmem:[#allocation7] sm:$0xff]
    %v83 = vld [vmem:[#allocation7 + $0x8] sm:$0xff]
    %v84 = vld [vmem:[#allocation7 + $0x10] sm:$0xff]
    %v85 = vld [vmem:[#allocation7 + $0x18] sm:$0xff]
    %v86 = vld [vmem:[#allocation7 + $0x20] sm:$0xff]
    %v87 = vld [vmem:[#allocation7 + $0x28] sm:$0xff]
    %v88 = vld [vmem:[#allocation7 + $0x30] sm:$0xff]
    %v89 = vld [vmem:[#allocation7 + $0x38] sm:$0xff]
    %s90 = scalar_lea.vmem [#allocation7], 64
    %v91 = vld [vmem:[%s90] sm:$0xff]
    %v92 = vld [vmem:[%s90 + $0x8] sm:$0xff]
    %v93 = vld [vmem:[%s90 + $0x10] sm:$0xff]
    %v94 = vld [vmem:[%s90 + $0x18] sm:$0xff]
    %v95 = vld [vmem:[%s90 + $0x20] sm:$0xff]
    %v96 = vld [vmem:[%s90 + $0x28] sm:$0xff]
    %v97 = vld [vmem:[%s90 + $0x30] sm:$0xff]
    %v98 = vld [vmem:[%s90 + $0x38] sm:$0xff]
    %s99 = scalar_lea.vmem [#allocation7], 128
    %v100 = vld [vmem:[%s99] sm:$0xff]
    %v101 = vld [vmem:[%s99 + $0x8] sm:$0xff]
    %v102 = vld [vmem:[%s99 + $0x10] sm:$0xff]
    %v103 = vld [vmem:[%s99 + $0x18] sm:$0xff]
    %v104 = vld [vmem:[%s99 + $0x20] sm:$0xff]
    %v105 = vld [vmem:[%s99 + $0x28] sm:$0xff]
    %v106 = vld [vmem:[%s99 + $0x30] sm:$0xff]
    %v107 = vld [vmem:[%s99 + $0x38] sm:$0xff]
    %s108 = scalar_lea.vmem [#allocation7], 192
    %v109 = vld [vmem:[%s108] sm:$0xff]
    %v110 = vld [vmem:[%s108 + $0x8] sm:$0xff]
    %v111 = vld [vmem:[%s108 + $0x10] sm:$0xff]
    %v112 = vld [vmem:[%s108 + $0x18] sm:$0xff]
    %v113 = vld [vmem:[%s108 + $0x20] sm:$0xff]
    %v114 = vld [vmem:[%s108 + $0x28] sm:$0xff]
    %v115 = vld [vmem:[%s108 + $0x30] sm:$0xff]
    %v116 = vld [vmem:[%s108 + $0x38] sm:$0xff]
    %v117 = vmax.f32 %v82, %v91
    %v118 = vmax.f32 %v83, %v92
    %v119 = vmax.f32 %v84, %v93
    %v120 = vmax.f32 %v85, %v94
    %v121 = vmax.f32 %v86, %v95
    %v122 = vmax.f32 %v87, %v96
    %v123 = vmax.f32 %v88, %v97
    %v124 = vmax.f32 %v89, %v98
    %v125 = vmax.f32 %v117, %v100
    %v126 = vmax.f32 %v118, %v101
    %v127 = vmax.f32 %v119, %v102
    %v128 = vmax.f32 %v120, %v103
    %v129 = vmax.f32 %v121, %v104
    %v130 = vmax.f32 %v122, %v105
    %v131 = vmax.f32 %v123, %v106
    %v132 = vmax.f32 %v124, %v107
    %v133 = vmax.f32 %v125, %v109
    %v134 = vmax.f32 %v126, %v110
    %v135 = vmax.f32 %v127, %v111
    %v136 = vmax.f32 %v128, %v112
    %v137 = vmax.f32 %v129, %v113
    %v138 = vmax.f32 %v130, %v114
    %v139 = vmax.f32 %v131, %v115
    %v140 = vmax.f32 %v132, %v116
    %v141 = vsub.f32 %v82, %v133
    %v142 = vsub.f32 %v83, %v134
    %v143 = vsub.f32 %v84, %v135
    %v144 = vsub.f32 %v85, %v136
    %v145 = vsub.f32 %v86, %v137
    %v146 = vsub.f32 %v87, %v138
    %v147 = vsub.f32 %v88, %v139
    %v148 = vsub.f32 %v89, %v140
    %v149 = vmul.f32 %v141, 1.442695
    %v150 = vpow.pop %v149
    %v151 = vmul.f32 %v142, 1.442695
    %v152 = vpow.pop %v151
    %v153 = vmul.f32 %v143, 1.442695
    %v154 = vpow.pop %v153
    %v155 = vmul.f32 %v144, 1.442695
    %v156 = vpow.pop %v155
    %v157 = vmul.f32 %v145, 1.442695
    %v158 = vpow.pop %v157
    %v159 = vmul.f32 %v146, 1.442695
    %v160 = vpow.pop %v159
    %v161 = vmul.f32 %v147, 1.442695
    %v162 = vpow.pop %v161
    %v163 = vmul.f32 %v148, 1.442695
    %v164 = vpow.pop %v163
    %vm165 = vcmp.eq.s32.totalorder %v74, 0
    %vm166 = vcmp.eq.s32.totalorder %v75, 0
    %vm167 = vcmp.eq.s32.totalorder %v76, 0
    %vm168 = vcmp.eq.s32.totalorder %v77, 0
    %vm169 = vcmp.eq.s32.totalorder %v78, 0
    %vm170 = vcmp.eq.s32.totalorder %v79, 0
    %vm171 = vcmp.eq.s32.totalorder %v80, 0
    %vm172 = vcmp.eq.s32.totalorder %v81, 0
    %v173 = vsel %vm165, %v82, 0.0
    %v174 = vsel %vm166, %v83, 0.0
    %v175 = vsel %vm167, %v84, 0.0
    %v176 = vsel %vm168, %v85, 0.0
    %v177 = vsel %vm169, %v86, 0.0
    %v178 = vsel %vm170, %v87, 0.0
    %v179 = vsel %vm171, %v88, 0.0
    %v180 = vsel %vm172, %v89, 0.0
    %v181 = vsub.f32 %v91, %v133
    %v182 = vsub.f32 %v92, %v134
    %v183 = vsub.f32 %v93, %v135
    %v184 = vsub.f32 %v94, %v136
    %v185 = vsub.f32 %v95, %v137
    %v186 = vsub.f32 %v96, %v138
    %v187 = vsub.f32 %v97, %v139
    %v188 = vsub.f32 %v98, %v140
    %v189 = vmul.f32 %v181, 1.442695
    %v190 = vpow.pop %v189
    %v191 = vmul.f32 %v182, 1.442695
    %v192 = vpow.pop %v191
    %v193 = vmul.f32 %v183, 1.442695
    %v194 = vpow.pop %v193
    %v195 = vmul.f32 %v184, 1.442695
    %v196 = vpow.pop %v195
    %v197 = vmul.f32 %v185, 1.442695
    %v198 = vpow.pop %v197
    %v199 = vmul.f32 %v186, 1.442695
    %v200 = vpow.pop %v199
    %v201 = vmul.f32 %v187, 1.442695
    %v202 = vpow.pop %v201
    %v203 = vmul.f32 %v188, 1.442695
    %v204 = vpow.pop %v203
    %v205 = vadd.f32 %v150, %v190
    %v206 = vadd.f32 %v152, %v192
    %v207 = vadd.f32 %v154, %v194
    %v208 = vadd.f32 %v156, %v196
    %v209 = vadd.f32 %v158, %v198
    %v210 = vadd.f32 %v160, %v200
    %v211 = vadd.f32 %v162, %v202
    %v212 = vadd.f32 %v164, %v204
    %vm213 = vcmp.eq.s32.totalorder %v74, 1
    %vm214 = vcmp.eq.s32.totalorder %v75, 1
    %vm215 = vcmp.eq.s32.totalorder %v76, 1
    %vm216 = vcmp.eq.s32.totalorder %v77, 1
    %vm217 = vcmp.eq.s32.totalorder %v78, 1
    %vm218 = vcmp.eq.s32.totalorder %v79, 1
    %vm219 = vcmp.eq.s32.totalorder %v80, 1
    %vm220 = vcmp.eq.s32.totalorder %v81, 1
    %v221 = vsel %vm213, %v91, 0.0
    %v222 = vsel %vm214, %v92, 0.0
    %v223 = vsel %vm215, %v93, 0.0
    %v224 = vsel %vm216, %v94, 0.0
    %v225 = vsel %vm217, %v95, 0.0
    %v226 = vsel %vm218, %v96, 0.0
    %v227 = vsel %vm219, %v97, 0.0
    %v228 = vsel %vm220, %v98, 0.0
    %v229 = vadd.f32 %v173, %v221
    %v230 = vadd.f32 %v174, %v222
    %v231 = vadd.f32 %v175, %v223
    %v232 = vadd.f32 %v176, %v224
    %v233 = vadd.f32 %v177, %v225
    %v234 = vadd.f32 %v178, %v226
    %v235 = vadd.f32 %v179, %v227
    %v236 = vadd.f32 %v180, %v228
    %v237 = vsub.f32 %v100, %v133
    %v238 = vsub.f32 %v101, %v134
    %v239 = vsub.f32 %v102, %v135
    %v240 = vsub.f32 %v103, %v136
    %v241 = vsub.f32 %v104, %v137
    %v242 = vsub.f32 %v105, %v138
    %v243 = vsub.f32 %v106, %v139
    %v244 = vsub.f32 %v107, %v140
    %v245 = vmul.f32 %v237, 1.442695
    %v246 = vpow.pop %v245
    %v247 = vmul.f32 %v238, 1.442695
    %v248 = vpow.pop %v247
    %v249 = vmul.f32 %v239, 1.442695
    %v250 = vpow.pop %v249
    %v251 = vmul.f32 %v240, 1.442695
    %v252 = vpow.pop %v251
    %v253 = vmul.f32 %v241, 1.442695
    %v254 = vpow.pop %v253
    %v255 = vmul.f32 %v242, 1.442695
    %v256 = vpow.pop %v255
    %v257 = vmul.f32 %v243, 1.442695
    %v258 = vpow.pop %v257
    %v259 = vmul.f32 %v244, 1.442695
    %v260 = vpow.pop %v259
    %v261 = vadd.f32 %v205, %v246
    %v262 = vadd.f32 %v206, %v248
    %v263 = vadd.f32 %v207, %v250
    %v264 = vadd.f32 %v208, %v252
    %v265 = vadd.f32 %v209, %v254
    %v266 = vadd.f32 %v210, %v256
    %v267 = vadd.f32 %v211, %v258
    %v268 = vadd.f32 %v212, %v260
    %vm269 = vcmp.eq.s32.totalorder %v74, 2
    %vm270 = vcmp.eq.s32.totalorder %v75, 2
    %vm271 = vcmp.eq.s32.totalorder %v76, 2
    %vm272 = vcmp.eq.s32.totalorder %v77, 2
    %vm273 = vcmp.eq.s32.totalorder %v78, 2
    %vm274 = vcmp.eq.s32.totalorder %v79, 2
    %vm275 = vcmp.eq.s32.totalorder %v80, 2
    %vm276 = vcmp.eq.s32.totalorder %v81, 2
    %v277 = vsel %vm269, %v100, 0.0
    %v278 = vsel %vm270, %v101, 0.0
    %v279 = vsel %vm271, %v102, 0.0
    %v280 = vsel %vm272, %v103, 0.0
    %v281 = vsel %vm273, %v104, 0.0
    %v282 = vsel %vm274, %v105, 0.0
    %v283 = vsel %vm275, %v106, 0.0
    %v284 = vsel %vm276, %v107, 0.0
    %v285 = vadd.f32 %v229, %v277
    %v286 = vadd.f32 %v230, %v278
    %v287 = vadd.f32 %v231, %v279
    %v288 = vadd.f32 %v232, %v280
    %v289 = vadd.f32 %v233, %v281
    %v290 = vadd.f32 %v234, %v282
    %v291 = vadd.f32 %v235, %v283
    %v292 = vadd.f32 %v236, %v284
    %v293 = vsub.f32 %v109, %v133
    %v294 = vsub.f32 %v110, %v134
    %v295 = vsub.f32 %v111, %v135
    %v296 = vsub.f32 %v112, %v136
    %v297 = vsub.f32 %v113, %v137
    %v298 = vsub.f32 %v114, %v138
    %v299 = vsub.f32 %v115, %v139
    %v300 = vsub.f32 %v116, %v140
    %v301 = vmul.f32 %v293, 1.442695
    %v302 = vpow.pop %v301
    %v303 = vmul.f32 %v294, 1.442695
    %v304 = vpow.pop %v303
    %v305 = vmul.f32 %v295, 1.442695
    %v306 = vpow.pop %v305
    %v307 = vmul.f32 %v296, 1.442695
    %v308 = vpow.pop %v307
    %v309 = vmul.f32 %v297, 1.442695
    %v310 = vpow.pop %v309
    %v311 = vmul.f32 %v298, 1.442695
    %v312 = vpow.pop %v311
    %v313 = vmul.f32 %v299, 1.442695
    %v314 = vpow.pop %v313
    %v315 = vmul.f32 %v300, 1.442695
    %v316 = vpow.pop %v315
    %v317 = vadd.f32 %v261, %v302
    %v318 = vadd.f32 %v262, %v304
    %v319 = vadd.f32 %v263, %v306
    %v320 = vadd.f32 %v264, %v308
    %v321 = vadd.f32 %v265, %v310
    %v322 = vadd.f32 %v266, %v312
    %v323 = vadd.f32 %v267, %v314
    %v324 = vadd.f32 %v268, %v316
    %vm325 = vcmp.eq.s32.totalorder %v74, 3
    %vm326 = vcmp.eq.s32.totalorder %v75, 3
    %vm327 = vcmp.eq.s32.totalorder %v76, 3
    %vm328 = vcmp.eq.s32.totalorder %v77, 3
    %vm329 = vcmp.eq.s32.totalorder %v78, 3
    %vm330 = vcmp.eq.s32.totalorder %v79, 3
    %vm331 = vcmp.eq.s32.totalorder %v80, 3
    %vm332 = vcmp.eq.s32.totalorder %v81, 3
    %v333 = vsel %vm325, %v109, 0.0
    %v334 = vsel %vm326, %v110, 0.0
    %v335 = vsel %vm327, %v111, 0.0
    %v336 = vsel %vm328, %v112, 0.0
    %v337 = vsel %vm329, %v113, 0.0
    %v338 = vsel %vm330, %v114, 0.0
    %v339 = vsel %vm331, %v115, 0.0
    %v340 = vsel %vm332, %v116, 0.0
    %v341 = vadd.f32 %v285, %v333
    %v342 = vadd.f32 %v286, %v334
    %v343 = vadd.f32 %v287, %v335
    %v344 = vadd.f32 %v288, %v336
    %v345 = vadd.f32 %v289, %v337
    %v346 = vadd.f32 %v290, %v338
    %v347 = vadd.f32 %v291, %v339
    %v348 = vadd.f32 %v292, %v340
    %v349 = vsub.f32 %v133, %v341
    %v350 = vsub.f32 %v134, %v342
    %v351 = vsub.f32 %v135, %v343
    %v352 = vsub.f32 %v136, %v344
    %v353 = vsub.f32 %v137, %v345
    %v354 = vsub.f32 %v138, %v346
    %v355 = vsub.f32 %v139, %v347
    %v356 = vsub.f32 %v140, %v348
    %v357 = vlog2.pop %v317
    %v358 = vmul.f32 %v357, 0.6931472
    %v359 = vlog2.pop %v318
    %v360 = vmul.f32 %v359, 0.6931472
    %v361 = vlog2.pop %v319
    %v362 = vmul.f32 %v361, 0.6931472
    %v363 = vlog2.pop %v320
    %v364 = vmul.f32 %v363, 0.6931472
    %v365 = vlog2.pop %v321
    %v366 = vmul.f32 %v365, 0.6931472
    %v367 = vlog2.pop %v322
    %v368 = vmul.f32 %v367, 0.6931472
    %v369 = vlog2.pop %v323
    %v370 = vmul.f32 %v369, 0.6931472
    %v371 = vlog2.pop %v324
    %v372 = vmul.f32 %v371, 0.6931472
    %v373 = vadd.f32 %v349, %v358
    %v374 = vadd.f32 %v350, %v360
    %v375 = vadd.f32 %v351, %v362
    %v376 = vadd.f32 %v352, %v364
    %v377 = vadd.f32 %v353, %v366
    %v378 = vadd.f32 %v354, %v368
    %v379 = vadd.f32 %v355, %v370
    %v380 = vadd.f32 %v356, %v372
    %vm381 = vcmp.eq.f32.partialorder %v100, %v133
    %vm382 = vcmp.eq.f32.partialorder %v101, %v134
    %vm383 = vcmp.eq.f32.partialorder %v102, %v135
    %vm384 = vcmp.eq.f32.partialorder %v103, %v136
    %vm385 = vcmp.eq.f32.partialorder %v104, %v137
    %vm386 = vcmp.eq.f32.partialorder %v105, %v138
    %vm387 = vcmp.eq.f32.partialorder %v106, %v139
    %vm388 = vcmp.eq.f32.partialorder %v107, %v140
    %v389 = vsel %vm381, 2, 3
    %v390 = vsel %vm382, 2, 3
    %v391 = vsel %vm383, 2, 3
    %v392 = vsel %vm384, 2, 3
    %v393 = vsel %vm385, 2, 3
    %v394 = vsel %vm386, 2, 3
    %v395 = vsel %vm387, 2, 3
    %v396 = vsel %vm388, 2, 3
    %vm397 = vcmp.eq.f32.partialorder %v91, %v133
    %vm398 = vcmp.eq.f32.partialorder %v92, %v134
    %vm399 = vcmp.eq.f32.partialorder %v93, %v135
    %vm400 = vcmp.eq.f32.partialorder %v94, %v136
    %vm401 = vcmp.eq.f32.partialorder %v95, %v137
    %vm402 = vcmp.eq.f32.partialorder %v96, %v138
    %vm403 = vcmp.eq.f32.partialorder %v97, %v139
    %vm404 = vcmp.eq.f32.partialorder %v98, %v140
    %v405 = vsel %vm397, 1, %v389
    %v406 = vsel %vm398, 1, %v390
    %v407 = vsel %vm399, 1, %v391
    %v408 = vsel %vm400, 1, %v392
    %v409 = vsel %vm401, 1, %v393
    %v410 = vsel %vm402, 1, %v394
    %v411 = vsel %vm403, 1, %v395
    %v412 = vsel %vm404, 1, %v396
    %vm413 = vcmp.eq.f32.partialorder %v82, %v133
    %vm414 = vcmp.eq.f32.partialorder %v83, %v134
    %vm415 = vcmp.eq.f32.partialorder %v84, %v135
    %vm416 = vcmp.eq.f32.partialorder %v85, %v136
    %vm417 = vcmp.eq.f32.partialorder %v86, %v137
    %vm418 = vcmp.eq.f32.partialorder %v87, %v138
    %vm419 = vcmp.eq.f32.partialorder %v88, %v139
    %vm420 = vcmp.eq.f32.partialorder %v89, %v140
    %v421 = vsel %vm413, 0, %v405
    %v422 = vsel %vm414, 0, %v406
    %v423 = vsel %vm415, 0, %v407
    %v424 = vsel %vm416, 0, %v408
    %v425 = vsel %vm417, 0, %v409
    %v426 = vsel %vm418, 0, %v410
    %v427 = vsel %vm419, 0, %v411
    %v428 = vsel %vm420, 0, %v412
    %s429 = sld [smem:[#allocation3]]
    %s430 = sld [smem:[#allocation3 + $0x1]]
    %s431 = sld [smem:[#allocation3 + $0x2]]
    %s432 = sld [smem:[#allocation3 + $0x3]]
    %s433 = sld [smem:[#allocation3 + $0x80]]
    %s434 = sld [smem:[#allocation3 + $0x81]]
    %s435 = sld [smem:[#allocation3 + $0x82]]
    %s436 = sld [smem:[#allocation3 + $0x83]]
    %s437 = sld [smem:[#allocation3 + $0x100]]
    %s438 = sld [smem:[#allocation3 + $0x101]]
    %s439 = sld [smem:[#allocation3 + $0x102]]
    %s440 = sld [smem:[#allocation3 + $0x103]]
    %s441 = sld [smem:[#allocation3 + $0x180]]
    %s442 = sld [smem:[#allocation3 + $0x181]]
    %s443 = sld [smem:[#allocation3 + $0x182]]
    %s444 = sld [smem:[#allocation3 + $0x183]]
    %v445 = vmul.u32 %v74, 4
    %v446 = vmul.u32 %v75, 4
    %v447 = vmul.u32 %v76, 4
    %v448 = vmul.u32 %v77, 4
    %v449 = vmul.u32 %v78, 4
    %v450 = vmul.u32 %v79, 4
    %v451 = vmul.u32 %v80, 4
    %v452 = vmul.u32 %v81, 4
    %v453 = vadd.s32 %v445, %v421
    %v454 = vadd.s32 %v446, %v422
    %v455 = vadd.s32 %v447, %v423
    %v456 = vadd.s32 %v448, %v424
    %v457 = vadd.s32 %v449, %v425
    %v458 = vadd.s32 %v450, %v426
    %v459 = vadd.s32 %v451, %v427
    %v460 = vadd.s32 %v452, %v428
    %vm461 = vcmp.eq.s32.totalorder %v453, 0
    %vm462 = vcmp.eq.s32.totalorder %v454, 0
    %vm463 = vcmp.eq.s32.totalorder %v455, 0
    %vm464 = vcmp.eq.s32.totalorder %v456, 0
    %vm465 = vcmp.eq.s32.totalorder %v457, 0
    %vm466 = vcmp.eq.s32.totalorder %v458, 0
    %vm467 = vcmp.eq.s32.totalorder %v459, 0
    %vm468 = vcmp.eq.s32.totalorder %v460, 0
    %v469 = vstv %s429
    %v470 = vsel %vm461, %v469, 0.0
    %v471 = vsel %vm462, %v469, 0.0
    %v472 = vsel %vm463, %v469, 0.0
    %v473 = vsel %vm464, %v469, 0.0
    %v474 = vsel %vm465, %v469, 0.0
    %v475 = vsel %vm466, %v469, 0.0
    %v476 = vsel %vm467, %v469, 0.0
    %v477 = vsel %vm468, %v469, 0.0
    %vm478 = vcmp.eq.s32.totalorder %v453, 1
    %vm479 = vcmp.eq.s32.totalorder %v454, 1
    %vm480 = vcmp.eq.s32.totalorder %v455, 1
    %vm481 = vcmp.eq.s32.totalorder %v456, 1
    %vm482 = vcmp.eq.s32.totalorder %v457, 1
    %vm483 = vcmp.eq.s32.totalorder %v458, 1
    %vm484 = vcmp.eq.s32.totalorder %v459, 1
    %vm485 = vcmp.eq.s32.totalorder %v460, 1
    %v486 = vstv %s430
    %v487 = vsel %vm478, %v486, %v470
    %v488 = vsel %vm479, %v486, %v471
    %v489 = vsel %vm480, %v486, %v472
    %v490 = vsel %vm481, %v486, %v473
    %v491 = vsel %vm482, %v486, %v474
    %v492 = vsel %vm483, %v486, %v475
    %v493 = vsel %vm484, %v486, %v476
    %v494 = vsel %vm485, %v486, %v477
    %vm495 = vcmp.eq.s32.totalorder %v453, 2
    %vm496 = vcmp.eq.s32.totalorder %v454, 2
    %vm497 = vcmp.eq.s32.totalorder %v455, 2
    %vm498 = vcmp.eq.s32.totalorder %v456, 2
    %vm499 = vcmp.eq.s32.totalorder %v457, 2
    %vm500 = vcmp.eq.s32.totalorder %v458, 2
    %vm501 = vcmp.eq.s32.totalorder %v459, 2
    %vm502 = vcmp.eq.s32.totalorder %v460, 2
    %v503 = vstv %s431
    %v504 = vsel %vm495, %v503, %v487
    %v505 = vsel %vm496, %v503, %v488
    %v506 = vsel %vm497, %v503, %v489
    %v507 = vsel %vm498, %v503, %v490
    %v508 = vsel %vm499, %v503, %v491
    %v509 = vsel %vm500, %v503, %v492
    %v510 = vsel %vm501, %v503, %v493
    %v511 = vsel %vm502, %v503, %v494
    %vm512 = vcmp.eq.s32.totalorder %v453, 3
    %vm513 = vcmp.eq.s32.totalorder %v454, 3
    %vm514 = vcmp.eq.s32.totalorder %v455, 3
    %vm515 = vcmp.eq.s32.totalorder %v456, 3
    %vm516 = vcmp.eq.s32.totalorder %v457, 3
    %vm517 = vcmp.eq.s32.totalorder %v458, 3
    %vm518 = vcmp.eq.s32.totalorder %v459, 3
    %vm519 = vcmp.eq.s32.totalorder %v460, 3
    %v520 = vstv %s432
    %v521 = vsel %vm512, %v520, %v504
    %v522 = vsel %vm513, %v520, %v505
    %v523 = vsel %vm514, %v520, %v506
    %v524 = vsel %vm515, %v520, %v507
    %v525 = vsel %vm516, %v520, %v508
    %v526 = vsel %vm517, %v520, %v509
    %v527 = vsel %vm518, %v520, %v510
    %v528 = vsel %vm519, %v520, %v511
    %vm529 = vcmp.eq.s32.totalorder %v453, 4
    %vm530 = vcmp.eq.s32.totalorder %v454, 4
    %vm531 = vcmp.eq.s32.totalorder %v455, 4
    %vm532 = vcmp.eq.s32.totalorder %v456, 4
    %vm533 = vcmp.eq.s32.totalorder %v457, 4
    %vm534 = vcmp.eq.s32.totalorder %v458, 4
    %vm535 = vcmp.eq.s32.totalorder %v459, 4
    %vm536 = vcmp.eq.s32.totalorder %v460, 4
    %v537 = vstv %s433
    %v538 = vsel %vm529, %v537, %v521
    %v539 = vsel %vm530, %v537, %v522
    %v540 = vsel %vm531, %v537, %v523
    %v541 = vsel %vm532, %v537, %v524
    %v542 = vsel %vm533, %v537, %v525
    %v543 = vsel %vm534, %v537, %v526
    %v544 = vsel %vm535, %v537, %v527
    %v545 = vsel %vm536, %v537, %v528
    %vm546 = vcmp.eq.s32.totalorder %v453, 5
    %vm547 = vcmp.eq.s32.totalorder %v454, 5
    %vm548 = vcmp.eq.s32.totalorder %v455, 5
    %vm549 = vcmp.eq.s32.totalorder %v456, 5
    %vm550 = vcmp.eq.s32.totalorder %v457, 5
    %vm551 = vcmp.eq.s32.totalorder %v458, 5
    %vm552 = vcmp.eq.s32.totalorder %v459, 5
    %vm553 = vcmp.eq.s32.totalorder %v460, 5
    %v554 = vstv %s434
    %v555 = vsel %vm546, %v554, %v538
    %v556 = vsel %vm547, %v554, %v539
    %v557 = vsel %vm548, %v554, %v540
    %v558 = vsel %vm549, %v554, %v541
    %v559 = vsel %vm550, %v554, %v542
    %v560 = vsel %vm551, %v554, %v543
    %v561 = vsel %vm552, %v554, %v544
    %v562 = vsel %vm553, %v554, %v545
    %vm563 = vcmp.eq.s32.totalorder %v453, 6
    %vm564 = vcmp.eq.s32.totalorder %v454, 6
    %vm565 = vcmp.eq.s32.totalorder %v455, 6
    %vm566 = vcmp.eq.s32.totalorder %v456, 6
    %vm567 = vcmp.eq.s32.totalorder %v457, 6
    %vm568 = vcmp.eq.s32.totalorder %v458, 6
    %vm569 = vcmp.eq.s32.totalorder %v459, 6
    %vm570 = vcmp.eq.s32.totalorder %v460, 6
    %v571 = vstv %s435
    %v572 = vsel %vm563, %v571, %v555
    %v573 = vsel %vm564, %v571, %v556
    %v574 = vsel %vm565, %v571, %v557
    %v575 = vsel %vm566, %v571, %v558
    %v576 = vsel %vm567, %v571, %v559
    %v577 = vsel %vm568, %v571, %v560
    %v578 = vsel %vm569, %v571, %v561
    %v579 = vsel %vm570, %v571, %v562
    %vm580 = vcmp.eq.s32.totalorder %v453, 7
    %vm581 = vcmp.eq.s32.totalorder %v454, 7
    %vm582 = vcmp.eq.s32.totalorder %v455, 7
    %vm583 = vcmp.eq.s32.totalorder %v456, 7
    %vm584 = vcmp.eq.s32.totalorder %v457, 7
    %vm585 = vcmp.eq.s32.totalorder %v458, 7
    %vm586 = vcmp.eq.s32.totalorder %v459, 7
    %vm587 = vcmp.eq.s32.totalorder %v460, 7
    %v588 = vstv %s436
    %v589 = vsel %vm580, %v588, %v572
    %v590 = vsel %vm581, %v588, %v573
    %v591 = vsel %vm582, %v588, %v574
    %v592 = vsel %vm583, %v588, %v575
    %v593 = vsel %vm584, %v588, %v576
    %v594 = vsel %vm585, %v588, %v577
    %v595 = vsel %vm586, %v588, %v578
    %v596 = vsel %vm587, %v588, %v579
    %vm597 = vcmp.eq.s32.totalorder %v453, 8
    %vm598 = vcmp.eq.s32.totalorder %v454, 8
    %vm599 = vcmp.eq.s32.totalorder %v455, 8
    %vm600 = vcmp.eq.s32.totalorder %v456, 8
    %vm601 = vcmp.eq.s32.totalorder %v457, 8
    %vm602 = vcmp.eq.s32.totalorder %v458, 8
    %vm603 = vcmp.eq.s32.totalorder %v459, 8
    %vm604 = vcmp.eq.s32.totalorder %v460, 8
    %v605 = vstv %s437
    %v606 = vsel %vm597, %v605, %v589
    %v607 = vsel %vm598, %v605, %v590
    %v608 = vsel %vm599, %v605, %v591
    %v609 = vsel %vm600, %v605, %v592
    %v610 = vsel %vm601, %v605, %v593
    %v611 = vsel %vm602, %v605, %v594
    %v612 = vsel %vm603, %v605, %v595
    %v613 = vsel %vm604, %v605, %v596
    %vm614 = vcmp.eq.s32.totalorder %v453, 9
    %vm615 = vcmp.eq.s32.totalorder %v454, 9
    %vm616 = vcmp.eq.s32.totalorder %v455, 9
    %vm617 = vcmp.eq.s32.totalorder %v456, 9
    %vm618 = vcmp.eq.s32.totalorder %v457, 9
    %vm619 = vcmp.eq.s32.totalorder %v458, 9
    %vm620 = vcmp.eq.s32.totalorder %v459, 9
    %vm621 = vcmp.eq.s32.totalorder %v460, 9
    %v622 = vstv %s438
    %v623 = vsel %vm614, %v622, %v606
    %v624 = vsel %vm615, %v622, %v607
    %v625 = vsel %vm616, %v622, %v608
    %v626 = vsel %vm617, %v622, %v609
    %v627 = vsel %vm618, %v622, %v610
    %v628 = vsel %vm619, %v622, %v611
    %v629 = vsel %vm620, %v622, %v612
    %v630 = vsel %vm621, %v622, %v613
    %vm631 = vcmp.eq.s32.totalorder %v453, 10
    %vm632 = vcmp.eq.s32.totalorder %v454, 10
    %vm633 = vcmp.eq.s32.totalorder %v455, 10
    %vm634 = vcmp.eq.s32.totalorder %v456, 10
    %vm635 = vcmp.eq.s32.totalorder %v457, 10
    %vm636 = vcmp.eq.s32.totalorder %v458, 10
    %vm637 = vcmp.eq.s32.totalorder %v459, 10
    %vm638 = vcmp.eq.s32.totalorder %v460, 10
    %v639 = vstv %s439
    %v640 = vsel %vm631, %v639, %v623
    %v641 = vsel %vm632, %v639, %v624
    %v642 = vsel %vm633, %v639, %v625
    %v643 = vsel %vm634, %v639, %v626
    %v644 = vsel %vm635, %v639, %v627
    %v645 = vsel %vm636, %v639, %v628
    %v646 = vsel %vm637, %v639, %v629
    %v647 = vsel %vm638, %v639, %v630
    %vm648 = vcmp.eq.s32.totalorder %v453, 11
    %vm649 = vcmp.eq.s32.totalorder %v454, 11
    %vm650 = vcmp.eq.s32.totalorder %v455, 11
    %vm651 = vcmp.eq.s32.totalorder %v456, 11
    %vm652 = vcmp.eq.s32.totalorder %v457, 11
    %vm653 = vcmp.eq.s32.totalorder %v458, 11
    %vm654 = vcmp.eq.s32.totalorder %v459, 11
    %vm655 = vcmp.eq.s32.totalorder %v460, 11
    %v656 = vstv %s440
    %v657 = vsel %vm648, %v656, %v640
    %v658 = vsel %vm649, %v656, %v641
    %v659 = vsel %vm650, %v656, %v642
    %v660 = vsel %vm651, %v656, %v643
    %v661 = vsel %vm652, %v656, %v644
    %v662 = vsel %vm653, %v656, %v645
    %v663 = vsel %vm654, %v656, %v646
    %v664 = vsel %vm655, %v656, %v647
    %vm665 = vcmp.eq.s32.totalorder %v453, 12
    %vm666 = vcmp.eq.s32.totalorder %v454, 12
    %vm667 = vcmp.eq.s32.totalorder %v455, 12
    %vm668 = vcmp.eq.s32.totalorder %v456, 12
    %vm669 = vcmp.eq.s32.totalorder %v457, 12
    %vm670 = vcmp.eq.s32.totalorder %v458, 12
    %vm671 = vcmp.eq.s32.totalorder %v459, 12
    %vm672 = vcmp.eq.s32.totalorder %v460, 12
    %v673 = vstv %s441
    %v674 = vsel %vm665, %v673, %v657
    %v675 = vsel %vm666, %v673, %v658
    %v676 = vsel %vm667, %v673, %v659
    %v677 = vsel %vm668, %v673, %v660
    %v678 = vsel %vm669, %v673, %v661
    %v679 = vsel %vm670, %v673, %v662
    %v680 = vsel %vm671, %v673, %v663
    %v681 = vsel %vm672, %v673, %v664
    %vm682 = vcmp.eq.s32.totalorder %v453, 13
    %vm683 = vcmp.eq.s32.totalorder %v454, 13
    %vm684 = vcmp.eq.s32.totalorder %v455, 13
    %vm685 = vcmp.eq.s32.totalorder %v456, 13
    %vm686 = vcmp.eq.s32.totalorder %v457, 13
    %vm687 = vcmp.eq.s32.totalorder %v458, 13
    %vm688 = vcmp.eq.s32.totalorder %v459, 13
    %vm689 = vcmp.eq.s32.totalorder %v460, 13
    %v690 = vstv %s442
    %v691 = vsel %vm682, %v690, %v674
    %v692 = vsel %vm683, %v690, %v675
    %v693 = vsel %vm684, %v690, %v676
    %v694 = vsel %vm685, %v690, %v677
    %v695 = vsel %vm686, %v690, %v678
    %v696 = vsel %vm687, %v690, %v679
    %v697 = vsel %vm688, %v690, %v680
    %v698 = vsel %vm689, %v690, %v681
    %vm699 = vcmp.eq.s32.totalorder %v453, 14
    %vm700 = vcmp.eq.s32.totalorder %v454, 14
    %vm701 = vcmp.eq.s32.totalorder %v455, 14
    %vm702 = vcmp.eq.s32.totalorder %v456, 14
    %vm703 = vcmp.eq.s32.totalorder %v457, 14
    %vm704 = vcmp.eq.s32.totalorder %v458, 14
    %vm705 = vcmp.eq.s32.totalorder %v459, 14
    %vm706 = vcmp.eq.s32.totalorder %v460, 14
    %v707 = vstv %s443
    %v708 = vsel %vm699, %v707, %v691
    %v709 = vsel %vm700, %v707, %v692
    %v710 = vsel %vm701, %v707, %v693
    %v711 = vsel %vm702, %v707, %v694
    %v712 = vsel %vm703, %v707, %v695
    %v713 = vsel %vm704, %v707, %v696
    %v714 = vsel %vm705, %v707, %v697
    %v715 = vsel %vm706, %v707, %v698
    %vm716 = vcmp.eq.s32.totalorder %v453, 15
    %vm717 = vcmp.eq.s32.totalorder %v454, 15
    %vm718 = vcmp.eq.s32.totalorder %v455, 15
    %vm719 = vcmp.eq.s32.totalorder %v456, 15
    %vm720 = vcmp.eq.s32.totalorder %v457, 15
    %vm721 = vcmp.eq.s32.totalorder %v458, 15
    %vm722 = vcmp.eq.s32.totalorder %v459, 15
    %vm723 = vcmp.eq.s32.totalorder %v460, 15
    %v724 = vstv %s444
    %v725 = vsel %vm716, %v724, %v708
    %v726 = vsel %vm717, %v724, %v709
    %v727 = vsel %vm718, %v724, %v710
    %v728 = vsel %vm719, %v724, %v711
    %v729 = vsel %vm720, %v724, %v712
    %v730 = vsel %vm721, %v724, %v713
    %v731 = vsel %vm722, %v724, %v714
    %v732 = vsel %vm723, %v724, %v715
    %v733 = vmul.f32 %v373, %v725
    %v734 = vmul.f32 %v374, %v726
    %v735 = vmul.f32 %v375, %v727
    %v736 = vmul.f32 %v376, %v728
    %v737 = vmul.f32 %v377, %v729
    %v738 = vmul.f32 %v378, %v730
    %v739 = vmul.f32 %v379, %v731
    %v740 = vmul.f32 %v380, %v732
    %s741 = sadd.s32 0, 0
    %s742 = smul.u32 %s741, 8192
    %s743 = sadd.s32 %s742, 8192
    %p744 = scmp.gt.s32.totalorder %s743, 8
    %p745 = scmp.le.s32.totalorder %s743, 8
    // Predicated region
    $region30: #{tpu_custom_call.1} parent=1 // pred_check
      %p746 = pneg %p745
    $region31: #{tpu_custom_call.1} parent=1 // pred_check_branch
      %748 = sbr.rel (%p746) target = $region33
    $region32: #{tpu_custom_call.1} parent=1 // pred_region
      %v749 = vld [vmem:[#allocation2] sm:$0xff]
      %v750 = vld [vmem:[#allocation2 + $0x8] sm:$0xff]
      %v751 = vld [vmem:[#allocation2 + $0x10] sm:$0xff]
      %v752 = vld [vmem:[#allocation2 + $0x18] sm:$0xff]
      %v753 = vld [vmem:[#allocation2 + $0x20] sm:$0xff]
      %v754 = vld [vmem:[#allocation2 + $0x28] sm:$0xff]
      %v755 = vld [vmem:[#allocation2 + $0x30] sm:$0xff]
      %v756 = vld [vmem:[#allocation2 + $0x38] sm:$0xff]
      %v757 = vadd.f32 %v749, %v733
      %v758 = vadd.f32 %v750, %v734
      %v759 = vadd.f32 %v751, %v735
      %v760 = vadd.f32 %v752, %v736
      %v761 = vadd.f32 %v753, %v737
      %v762 = vadd.f32 %v754, %v738
      %v763 = vadd.f32 %v755, %v739
      %v764 = vadd.f32 %v756, %v740
      %765 = vst [vmem:[#allocation2] sm:$0xff] %v757
      %766 = vst [vmem:[#allocation2 + $0x8] sm:$0xff] %v758
      %767 = vst [vmem:[#allocation2 + $0x10] sm:$0xff] %v759
      %768 = vst [vmem:[#allocation2 + $0x18] sm:$0xff] %v760
      %769 = vst [vmem:[#allocation2 + $0x20] sm:$0xff] %v761
      %770 = vst [vmem:[#allocation2 + $0x28] sm:$0xff] %v762
      %771 = vst [vmem:[#allocation2 + $0x30] sm:$0xff] %v763
      %772 = vst [vmem:[#allocation2 + $0x38] sm:$0xff] %v764
    $region33: #{tpu_custom_call.1} parent=1 // pred_fallthru
      _
    // Predicated region
    $region34: #{tpu_custom_call.1} parent=1 // pred_check
      %p773 = pneg %p744
    $region35: #{tpu_custom_call.1} parent=1 // pred_check_branch
      %775 = sbr.rel (%p773) target = $region37
    $region36: #{tpu_custom_call.1} parent=1 // pred_region
      %v776 = vlaneseq
      %v777 = vshrl.u32 %v776, 7
      %v778 = vlaneseq
      %v779 = vand.u32 %v778, 127
      %v780 = vadd.s32 %v779, 128
      %v781 = vadd.s32 %v779, 256
      %v782 = vadd.s32 %v779, 384
      %v783 = vadd.s32 %v779, 512
      %v784 = vadd.s32 %v779, 640
      %v785 = vadd.s32 %v779, 768
      %v786 = vadd.s32 %v779, 896
      %v787 = vmul.u32 %v777, 1024
      %v788 = vstv %s742
      %v789 = vadd.s32 %v788, %v787
      %v790 = vadd.s32 %v789, %v779
      %v791 = vadd.s32 %v789, %v780
      %v792 = vadd.s32 %v789, %v781
      %v793 = vadd.s32 %v789, %v782
      %v794 = vadd.s32 %v789, %v783
      %v795 = vadd.s32 %v789, %v784
      %v796 = vadd.s32 %v789, %v785
      %v797 = vadd.s32 %v789, %v786
      %v798 = vld [vmem:[#allocation2] sm:$0xff]
      %v799 = vld [vmem:[#allocation2 + $0x8] sm:$0xff]
      %v800 = vld [vmem:[#allocation2 + $0x10] sm:$0xff]
      %v801 = vld [vmem:[#allocation2 + $0x18] sm:$0xff]
      %v802 = vld [vmem:[#allocation2 + $0x20] sm:$0xff]
      %v803 = vld [vmem:[#allocation2 + $0x28] sm:$0xff]
      %v804 = vld [vmem:[#allocation2 + $0x30] sm:$0xff]
      %v805 = vld [vmem:[#allocation2 + $0x38] sm:$0xff]
      %vm806 = vcmp.lt.s32.totalorder %v790, 8
      %vm807 = vcmp.lt.s32.totalorder %v791, 8
      %vm808 = vcmp.lt.s32.totalorder %v792, 8
      %vm809 = vcmp.lt.s32.totalorder %v793, 8
      %vm810 = vcmp.lt.s32.totalorder %v794, 8
      %vm811 = vcmp.lt.s32.totalorder %v795, 8
      %vm812 = vcmp.lt.s32.totalorder %v796, 8
      %vm813 = vcmp.lt.s32.totalorder %v797, 8
      %v814 = vsel %vm806, %v733, 0.0
      %v815 = vsel %vm807, %v734, 0.0
      %v816 = vsel %vm808, %v735, 0.0
      %v817 = vsel %vm809, %v736, 0.0
      %v818 = vsel %vm810, %v737, 0.0
      %v819 = vsel %vm811, %v738, 0.0
      %v820 = vsel %vm812, %v739, 0.0
      %v821 = vsel %vm813, %v740, 0.0
      %v822 = vadd.f32 %v798, %v814
      %v823 = vadd.f32 %v799, %v815
      %v824 = vadd.f32 %v800, %v816
      %v825 = vadd.f32 %v801, %v817
      %v826 = vadd.f32 %v802, %v818
      %v827 = vadd.f32 %v803, %v819
      %v828 = vadd.f32 %v804, %v820
      %v829 = vadd.f32 %v805, %v821
      %830 = vst [vmem:[#allocation2] sm:$0xff] %v822
      %831 = vst [vmem:[#allocation2 + $0x8] sm:$0xff] %v823
      %832 = vst [vmem:[#allocation2 + $0x10] sm:$0xff] %v824
      %833 = vst [vmem:[#allocation2 + $0x18] sm:$0xff] %v825
      %834 = vst [vmem:[#allocation2 + $0x20] sm:$0xff] %v826
      %835 = vst [vmem:[#allocation2 + $0x28] sm:$0xff] %v827
      %836 = vst [vmem:[#allocation2 + $0x30] sm:$0xff] %v828
      %837 = vst [vmem:[#allocation2 + $0x38] sm:$0xff] %v829
    $region37: #{tpu_custom_call.1} parent=1 // pred_fallthru
      _
    // Predicated region
    $region38: #{tpu_custom_call.1} parent=1 // pred_check
      %p838 = pneg %p62
    $region39: #{tpu_custom_call.1} parent=1 // pred_check_branch
      %840 = sbr.rel (%p838) target = $region41
    $region40: #{tpu_custom_call.1} parent=1 // pred_region
      %v841 = vld [vmem:[#allocation2] sm:$0xff]
      %v842 = vld [vmem:[#allocation2 + $0x8] sm:$0xff]
      %v843 = vld [vmem:[#allocation2 + $0x10] sm:$0xff]
      %v844 = vld [vmem:[#allocation2 + $0x18] sm:$0xff]
      %v845 = vld [vmem:[#allocation2 + $0x20] sm:$0xff]
      %v846 = vld [vmem:[#allocation2 + $0x28] sm:$0xff]
      %v847 = vld [vmem:[#allocation2 + $0x30] sm:$0xff]
      %v848 = vld [vmem:[#allocation2 + $0x38] sm:$0xff]
      %v849 = vadd.f32 %v841, %v842
      %v850 = vadd.f32 %v849, %v843
      %v851 = vadd.f32 %v850, %v844
      %v852 = vadd.f32 %v851, %v845
      %v853 = vadd.f32 %v852, %v846
      %v854 = vadd.f32 %v853, %v847
      %v855 = vadd.f32 %v854, %v848
      %856 = vadd.xlane.f32.xlu0 %v855
      %v857 = vpop.xlane.xlu0 %856
      %v858 = vrot.slane %v857, 4
      %v859 = vadd.f32 %v857, %v858
      %v860 = vrot.slane %v859, 2
      %v861 = vadd.f32 %v859, %v860
      %v862 = vrot.slane %v861, 1
      %v863 = vadd.f32 %v861, %v862
      %vm864 = vcmask 0
      %865 = vst.msk [vmem:[#allocation10] sm:$0x1] %vm864, %v863
    $region41: #{tpu_custom_call.1} parent=1 // pred_fallthru
      _
    // Predicated region
    $region42: #{tpu_custom_call.1} parent=1 // pred_check
      _
    $region43: #{tpu_custom_call.1} parent=1 // pred_check_branch
      %867 = sbr.rel (0) target = $region45
    $region44: #{tpu_custom_call.1} parent=1 // pred_region
      %s869 = ssub.s32 16, 16
      %870 = vsyncadd [#allocation5], %s869
      %s872 = sshll.u32 [#allocation10], 4
      %s873 = int_to_ptr.vmem [resolvable:$true] %s872
      %875 = dma.vmem_to_hbm [thread:$0]  %s873, 16, %s3, [#allocation5]
    $region45: #{tpu_custom_call.1} parent=1 // pred_fallthru
      _
    // Predicated region
    $region46: #{tpu_custom_call.1} parent=1 // pred_check
      _
    $region47: #{tpu_custom_call.1} parent=1 // pred_check_branch
      %877 = sbr.rel (0) target = $region49
    $region48: #{tpu_custom_call.1} parent=1 // pred_region
      %878 = dma.done [#allocation5], 16
    $region49: #{tpu_custom_call.1} parent=1 // pred_fallthru
      _
    %879 = vsyncpa [#allocation4], 1
    %880 = vsyncpa [#allocation9], 1
    %881 = vsyncpa [#allocation5], 1
    %882 = vsyncpa [#allocation6], 1

</llo_original>
